<compile_context>
chip_gen: v5e
topology: v5e:2x2
jax: 0.10.0
libtpu: 0.0.40
codegen_flags: <defaults>
</compile_context>

<pallas_src>
import functools

import jax
import jax.numpy as jnp
from jax import lax
from jax.experimental import pallas as pl
from jax.experimental.pallas import tpu as pltpu

KH = KW = 3   # kernel_size=3
PAD = 1       # padding=1
STRIDE = 1    # stride=1


def _conv3x3_kernel(x_ref, w_ref, o_ref, rhs_ref, *, W):
    # x_ref  : (Cin_pad, Lpad)      flat row-major image, zero-padded by W+1 each side
    # w_ref  : (Cout, 9*Cin_pad)    flattened weights, K ordered tap-major then channel
    # o_ref  : (Cout, H*W)          lane-dense output tile (spatial on the lane axis)
    # rhs_ref: (9*Cin_pad, H*W)     VMEM scratch: stacked (im2col) RHS
    cin_pad, lpad = x_ref.shape
    hw = o_ref.shape[1]

    x = x_ref[...]

    # Column index of every flat *padded* position, built once at (1, Lpad).
    fcol = lax.broadcasted_iota(jnp.int32, (1, lpad), 1) % W
    # Pre-masked copies of the whole padded slab (2 masked passes instead of 6):
    #   kw==0 taps must be zero exactly where flat%W==0 (left-edge outputs),
    #   kw==2 taps must be zero exactly where flat%W==1 (right-edge outputs).
    # Broadcast multiply by a 0/1 row keeps this on plain VPU muls.
    keep_l = (fcol != 0).astype(x.dtype)
    keep_r = (fcol != 1).astype(x.dtype)
    x_l = x * keep_l
    x_r = x * keep_r

    # Stack the 9 lane-shifted taps into one (9*Cin_pad, H*W) RHS.  Each tap is a
    # static lane-offset slice of the flat padded slab (row stride W => shift by
    # kh*W + kw realizes tap (kh, kw)); each write is sublane-aligned because
    # Cin_pad is a sublane multiple.  All rows are rewritten every step, so the
    # persistent scratch never carries stale data across grid iterations.
    for kh in range(KH):
        for kw in range(KW):
            t = kh * KW + kw
            src = x_l if kw == 0 else (x_r if kw == KW - 1 else x)
            start = kh * W + kw                       # static -> cheap lane shift
            rhs_ref[pl.ds(t * cin_pad, cin_pad), :] = src[:, start:start + hw]

    # Single merged MXU matmul, f32 accumulation, single output store.
    o_ref[...] = jnp.dot(
        w_ref[...], rhs_ref[...],
        preferred_element_type=jnp.float32).astype(o_ref.dtype)


def conv2d_basic(x_nchw, w_oihw, *, compute_dtype=None):
    """Forward pass of Conv2d_basic. x: (N, Cin, H, W), w: (Cout, Cin, 3, 3).

    compute_dtype: optionally cast activations/weights (e.g. jnp.bfloat16 on
    v6e/v7x) before the kernel; accumulation stays in f32.
    """
    N, Cin, H, W = x_nchw.shape
    Cout = w_oihw.shape[0]
    HW = H * W
    Lpad = HW + 2 * W + 2  # flat length after padding W+1 zeros on each side

    dtype = jnp.dtype(compute_dtype) if compute_dtype is not None else x_nchw.dtype
    sublane = 8 * (4 // dtype.itemsize)          # rows per vreg tile: 8 f32 / 16 bf16
    Cin_pad = ((Cin + sublane - 1) // sublane) * sublane
    K = KH * KW * Cin_pad

    # Single flat zero-pad (one HBM pass, no transposes): W+1 zeros on each side of
    # the row-major image give the top/bottom pad rows plus the extra element so the
    # last tap slice stays in bounds; channel dim padded to Cin_pad so the stacked-RHS
    # writes are sublane-aligned.  Left/right column halo handled in-kernel.
    x_flat = jnp.pad(x_nchw.reshape(N, Cin, HW),
                     ((0, 0), (0, Cin_pad - Cin), (W + 1, W + 1)))

    # (Cout, Cin, 3, 3) -> (Cout, 9*Cin_pad), K ordered (kh, kw)-major then channel to
    # match the stacked-RHS layout rhs[(kh*3+kw)*Cin_pad + c, p]; tiny tensor.
    w_k = jnp.pad(w_oihw, ((0, 0), (0, Cin_pad - Cin), (0, 0), (0, 0)))
    w_k = jnp.transpose(w_k, (0, 2, 3, 1)).reshape(Cout, K)

    if compute_dtype is not None:
        x_flat = x_flat.astype(compute_dtype)
        w_k = w_k.astype(compute_dtype)

    kernel = functools.partial(_conv3x3_kernel, W=W)

    flops = 2 * N * HW * Cin * Cout * KH * KW
    bytes_accessed = (x_flat.size * x_flat.dtype.itemsize
                      + w_k.size * w_k.dtype.itemsize
                      + N * Cout * HW * x_nchw.dtype.itemsize)

    out_flat = pl.pallas_call(
        kernel,
        out_shape=jax.ShapeDtypeStruct((N, Cout, HW), x_nchw.dtype),
        grid_spec=pltpu.PrefetchScalarGridSpec(
            num_scalar_prefetch=0,
            grid=(N,),  # one program per batch element; parallel (v7x megacore)
            in_specs=[
                # Whole flat image per batch element (tiny at these sizes).
                pl.BlockSpec((None, Cin_pad, Lpad), lambda n: (n, 0, 0)),
                # Weights: constant block index -> DMA'd once, stays resident.
                pl.BlockSpec((Cout, K), lambda n: (0, 0)),
            ],
            # Lane-dense output: last dim H*W (=256) on the 128-lane axis.
            out_specs=pl.BlockSpec((None, Cout, HW), lambda n: (n, 0, 0)),
            # Stacked-RHS scratch (im2col buffer); fully rewritten each step.
            scratch_shapes=[pltpu.VMEM((K, HW), x_flat.dtype)],
        ),
        compiler_params=pltpu.CompilerParams(
            dimension_semantics=("parallel",)),
        cost_estimate=pl.CostEstimate(
            flops=flops, transcendentals=0, bytes_accessed=bytes_accessed),
    )(x_flat, w_k)

    # Free reshape (contiguous) back to NCHW — no transpose pass.
    return out_flat.reshape(N, Cout, H, W)


if __name__ == "__main__":
    key = jax.random.PRNGKey(0)
    kx, kw_key = jax.random.split(key)

    N, Cin, Cout, H, W = 2, 4, 8, 16, 16

    x = jax.random.normal(kx, (N, Cin, H, W), dtype=jnp.float32)
    # Deterministic weight init (kaiming-uniform-like bound, as nn.Conv2d default).
    fan_in = Cin * KH * KW
    bound = 1.0 / (fan_in ** 0.5)
    w = jax.random.uniform(kw_key, (Cout, Cin, KH, KW), dtype=jnp.float32,
                           minval=-bound, maxval=bound)

    out = conv2d_basic(x, w)
    out = jax.block_until_ready(out)

    # Correctness check against XLA's conv.
    ref = jax.lax.conv_general_dilated(
        x, w, window_strides=(STRIDE, STRIDE),
        padding=((PAD, PAD), (PAD, PAD)),
        dimension_numbers=("NCHW", "OIHW", "NCHW"))
    assert out.shape == (N, Cout, H, W)
    assert jnp.allclose(out, ref, atol=1e-4, rtol=1e-4)

    print("KERNEL_OK")
</pallas_src>

<mosaic_0001>
module attributes {stable_mosaic.version = 11 : i64} {
  func.func @_conv3x3_kernel(%arg0: i32, %arg1: memref<1x8x290xf32, #tpu.memory_space<vmem>>, %arg2: memref<8x72xf32, #tpu.memory_space<vmem>>, %arg3: memref<1x8x256xf32, #tpu.memory_space<vmem>>, %arg4: memref<72x256xf32, #tpu.memory_space<vmem>>) attributes {dimension_semantics = [#tpu.dimension_semantics<parallel>], iteration_bounds = array<i64: 2>, scalar_prefetch = 0 : i64, scratch_operands = 1 : i64, tpu.core_type = #tpu.core_type<tc>, window_params = [{transform_indices = @transform_0, window_bounds = array<i64: 1, 8, 290>}, {pipeline_mode = #tpu.pipeline_mode<synchronous>, transform_indices = @transform_1, window_bounds = array<i64: 8, 72>}, {transform_indices = @transform_2, window_bounds = array<i64: 1, 8, 256>}]} {
    %c0 = arith.constant 0 : index
    %c0_0 = arith.constant 0 : index
    %c0_1 = arith.constant 0 : index
    %0 = vector.load %arg1[%c0, %c0_0, %c0_1] : memref<1x8x290xf32, #tpu.memory_space<vmem>>, vector<1x8x290xf32>
    %1 = vector.shape_cast %0 : vector<1x8x290xf32> to vector<8x290xf32>
    %2 = tpu.iota {dimensions = array<i32: 1>} : vector<1x290xi32>
    %c16_i32 = arith.constant 16 : i32
    %c0_i32 = arith.constant 0 : i32
    %3 = arith.cmpi eq, %c16_i32, %c0_i32 : i32
    %c1_i32 = arith.constant 1 : i32
    %4 = arith.select %3, %c1_i32, %c16_i32 : i32
    %5 = vector.broadcast %4 : i32 to vector<1x290xi32>
    %6 = arith.remsi %2, %5 : vector<1x290xi32>
    %c0_i32_2 = arith.constant 0 : i32
    %7 = vector.broadcast %c0_i32_2 : i32 to vector<1x290xi32>
    %8 = arith.cmpi ne, %6, %7 : vector<1x290xi32>
    %c0_i32_3 = arith.constant 0 : i32
    %9 = vector.broadcast %c0_i32_3 : i32 to vector<1x290xi32>
    %10 = arith.cmpi slt, %6, %9 : vector<1x290xi32>
    %c0_i32_4 = arith.constant 0 : i32
    %11 = arith.cmpi slt, %4, %c0_i32_4 : i32
    %12 = vector.broadcast %11 : i1 to vector<1x290xi1>
    %13 = vector.broadcast %12 : vector<1x290xi1> to vector<1x290xi1>
    %14 = arith.xori %10, %13 : vector<1x290xi1>
    %15 = arith.andi %14, %8 : vector<1x290xi1>
    %16 = vector.broadcast %4 : i32 to vector<1x290xi32>
    %17 = arith.addi %6, %16 : vector<1x290xi32>
    %18 = arith.select %15, %17, %6 : vector<1x290xi1>, vector<1x290xi32>
    %c0_i32_5 = arith.constant 0 : i32
    %19 = vector.broadcast %c0_i32_5 : i32 to vector<1x290xi32>
    %20 = arith.cmpi ne, %18, %19 : vector<1x290xi32>
    %21 = arith.extui %20 : vector<1x290xi1> to vector<1x290xi32>
    %22 = arith.sitofp %21 : vector<1x290xi32> to vector<1x290xf32>
    %c1_i32_6 = arith.constant 1 : i32
    %23 = vector.broadcast %c1_i32_6 : i32 to vector<1x290xi32>
    %24 = arith.cmpi ne, %18, %23 : vector<1x290xi32>
    %25 = arith.extui %24 : vector<1x290xi1> to vector<1x290xi32>
    %26 = arith.sitofp %25 : vector<1x290xi32> to vector<1x290xf32>
    %27 = vector.broadcast %22 : vector<1x290xf32> to vector<8x290xf32>
    %28 = arith.mulf %1, %27 : vector<8x290xf32>
    %29 = vector.broadcast %26 : vector<1x290xf32> to vector<8x290xf32>
    %30 = arith.mulf %1, %29 : vector<8x290xf32>
    %31 = vector.extract_strided_slice %28 {offsets = [0, 0], sizes = [8, 256], strides = [1, 1]} : vector<8x290xf32> to vector<8x256xf32>
    %c0_7 = arith.constant 0 : index
    %c0_8 = arith.constant 0 : index
    %32 = vector.load %arg4[%c0_7, %c0_8] : memref<72x256xf32, #tpu.memory_space<vmem>>, vector<8x256xf32>
    tpu.vector_store %arg4[%c0_7, %c0_8], %31 {strides = array<i32>} : memref<72x256xf32, #tpu.memory_space<vmem>>, vector<8x256xf32>,
    %33 = vector.extract_strided_slice %1 {offsets = [0, 1], sizes = [8, 256], strides = [1, 1]} : vector<8x290xf32> to vector<8x256xf32>
    %c8 = arith.constant 8 : index
    %c0_9 = arith.constant 0 : index
    %34 = vector.load %arg4[%c8, %c0_9] : memref<72x256xf32, #tpu.memory_space<vmem>>, vector<8x256xf32>
    tpu.vector_store %arg4[%c8, %c0_9], %33 {strides = array<i32>} : memref<72x256xf32, #tpu.memory_space<vmem>>, vector<8x256xf32>,
    %35 = vector.extract_strided_slice %30 {offsets = [0, 2], sizes = [8, 256], strides = [1, 1]} : vector<8x290xf32> to vector<8x256xf32>
    %c16 = arith.constant 16 : index
    %c0_10 = arith.constant 0 : index
    %36 = vector.load %arg4[%c16, %c0_10] : memref<72x256xf32, #tpu.memory_space<vmem>>, vector<8x256xf32>
    tpu.vector_store %arg4[%c16, %c0_10], %35 {strides = array<i32>} : memref<72x256xf32, #tpu.memory_space<vmem>>, vector<8x256xf32>,
    %37 = vector.extract_strided_slice %28 {offsets = [0, 16], sizes = [8, 256], strides = [1, 1]} : vector<8x290xf32> to vector<8x256xf32>
    %c24 = arith.constant 24 : index
    %c0_11 = arith.constant 0 : index
    %38 = vector.load %arg4[%c24, %c0_11] : memref<72x256xf32, #tpu.memory_space<vmem>>, vector<8x256xf32>
    tpu.vector_store %arg4[%c24, %c0_11], %37 {strides = array<i32>} : memref<72x256xf32, #tpu.memory_space<vmem>>, vector<8x256xf32>,
    %39 = vector.extract_strided_slice %1 {offsets = [0, 17], sizes = [8, 256], strides = [1, 1]} : vector<8x290xf32> to vector<8x256xf32>
    %c32 = arith.constant 32 : index
    %c0_12 = arith.constant 0 : index
    %40 = vector.load %arg4[%c32, %c0_12] : memref<72x256xf32, #tpu.memory_space<vmem>>, vector<8x256xf32>
    tpu.vector_store %arg4[%c32, %c0_12], %39 {strides = array<i32>} : memref<72x256xf32, #tpu.memory_space<vmem>>, vector<8x256xf32>,
    %41 = vector.extract_strided_slice %30 {offsets = [0, 18], sizes = [8, 256], strides = [1, 1]} : vector<8x290xf32> to vector<8x256xf32>
    %c40 = arith.constant 40 : index
    %c0_13 = arith.constant 0 : index
    %42 = vector.load %arg4[%c40, %c0_13] : memref<72x256xf32, #tpu.memory_space<vmem>>, vector<8x256xf32>
    tpu.vector_store %arg4[%c40, %c0_13], %41 {strides = array<i32>} : memref<72x256xf32, #tpu.memory_space<vmem>>, vector<8x256xf32>,
    %43 = vector.extract_strided_slice %28 {offsets = [0, 32], sizes = [8, 256], strides = [1, 1]} : vector<8x290xf32> to vector<8x256xf32>
    %c48 = arith.constant 48 : index
    %c0_14 = arith.constant 0 : index
    %44 = vector.load %arg4[%c48, %c0_14] : memref<72x256xf32, #tpu.memory_space<vmem>>, vector<8x256xf32>
    tpu.vector_store %arg4[%c48, %c0_14], %43 {strides = array<i32>} : memref<72x256xf32, #tpu.memory_space<vmem>>, vector<8x256xf32>,
    %45 = vector.extract_strided_slice %1 {offsets = [0, 33], sizes = [8, 256], strides = [1, 1]} : vector<8x290xf32> to vector<8x256xf32>
    %c56 = arith.constant 56 : index
    %c0_15 = arith.constant 0 : index
    %46 = vector.load %arg4[%c56, %c0_15] : memref<72x256xf32, #tpu.memory_space<vmem>>, vector<8x256xf32>
    tpu.vector_store %arg4[%c56, %c0_15], %45 {strides = array<i32>} : memref<72x256xf32, #tpu.memory_space<vmem>>, vector<8x256xf32>,
    %47 = vector.extract_strided_slice %30 {offsets = [0, 34], sizes = [8, 256], strides = [1, 1]} : vector<8x290xf32> to vector<8x256xf32>
    %c64 = arith.constant 64 : index
    %c0_16 = arith.constant 0 : index
    %48 = vector.load %arg4[%c64, %c0_16] : memref<72x256xf32, #tpu.memory_space<vmem>>, vector<8x256xf32>
    tpu.vector_store %arg4[%c64, %c0_16], %47 {strides = array<i32>} : memref<72x256xf32, #tpu.memory_space<vmem>>, vector<8x256xf32>,
    %c0_17 = arith.constant 0 : index
    %c0_18 = arith.constant 0 : index
    %49 = vector.load %arg2[%c0_17, %c0_18] : memref<8x72xf32, #tpu.memory_space<vmem>>, vector<8x72xf32>
    %c0_19 = arith.constant 0 : index
    %c0_20 = arith.constant 0 : index
    %50 = vector.load %arg4[%c0_19, %c0_20] : memref<72x256xf32, #tpu.memory_space<vmem>>, vector<72x256xf32>
    %cst = arith.constant dense<0.000000e+00> : vector<8x256xf32>
    %51 = tpu.matmul %49, %50, %cst {dimension_numbers = #tpu.dot_dimension_numbers<[1], [0], [0], [1], [0, 0, 1, 1], [], []>} : vector<8x72xf32>, vector<72x256xf32>, vector<8x256xf32> -> vector<8x256xf32>
    %c0_21 = arith.constant 0 : index
    %c0_22 = arith.constant 0 : index
    %c0_23 = arith.constant 0 : index
    %52 = vector.load %arg3[%c0_21, %c0_22, %c0_23] : memref<1x8x256xf32, #tpu.memory_space<vmem>>, vector<1x8x256xf32>
    %53 = vector.shape_cast %52 : vector<1x8x256xf32> to vector<8x256xf32>
    %54 = vector.shape_cast %51 : vector<8x256xf32> to vector<1x8x256xf32>
    tpu.vector_store %arg3[%c0_21, %c0_22, %c0_23], %54 {strides = array<i32>} : memref<1x8x256xf32, #tpu.memory_space<vmem>>, vector<1x8x256xf32>,
    return
  }
  func.func @transform_0(%arg0: i32) -> (i32, i32, i32) {
    %c0_i32 = arith.constant 0 : i32
    %c0_i32_0 = arith.constant 0 : i32
    %c0_i32_1 = arith.constant 0 : i32
    return %arg0, %c0_i32, %c0_i32_0 : i32, i32, i32
  }
  func.func @transform_1(%arg0: i32) -> (i32, i32) {
    %c0_i32 = arith.constant 0 : i32
    %c0_i32_0 = arith.constant 0 : i32
    %c0_i32_1 = arith.constant 0 : i32
    return %c0_i32, %c0_i32_0 : i32, i32
  }
  func.func @transform_2(%arg0: i32) -> (i32, i32, i32) {
    %c0_i32 = arith.constant 0 : i32
    %c0_i32_0 = arith.constant 0 : i32
    %c0_i32_1 = arith.constant 0 : i32
    return %arg0, %c0_i32, %c0_i32_0 : i32, i32, i32
  }
}

</mosaic_0001>

<llo_original>
// kernel: tpu_custom_call.1
$region0: #{tpu_custom_call.1}
  #allocation0 [shape = 'u32[]', space=smem, size = 0x4, offset = 0x4, fixed_abs, tag = 'smem constant byte address 0x4 - core index']
  #allocation1 [shape = 'u32[72,128]{1,0:T(1,128)}', space=vmem, size = 0x9000, scoped, tag = 'internal scratch']
  #allocation2 [shape = 'f32[72,256]{1,0:T(8,128)}', space=vmem, size = 0x12000, scoped, tag = 'scratch operand']
  %s0 = inlined_call_operand.hbm [shape: f32[2,8,290], index: 0, kind: input, shape index: {}]
  %s1 = inlined_call_operand.hbm [shape: f32[8,72], index: 1, kind: input, shape index: {}]
  %s2 = inlined_call_operand.hbm [shape: f32[2,8,256], index: 2, kind: output, shape index: {}]
  %s3 = sld [smem:[#allocation0]]
  $region49: #{tpu_custom_call.1} parent=0
    _
  %s5 = ssub.s32 1, %s3
  %s6 = scalar_select 0, %s5, %s3
  $region1: #{tpu_custom_call.1} parent=0
    #allocation3 [shape = 'u8[24576]{0}', space=vmem, size = 0x6000, scoped, tag = 'input window, operand 0']
    #allocation4 [shape = 's32[2]{0}', space=sflag, size = 0x8, scoped, tag = 'scoped memory for tpu_custom_call.1']
    #allocation5 [shape = 's32[2]{0}', space=sflag, size = 0x8, scoped, tag = 'scoped memory for tpu_custom_call.1']
    #allocation6 [shape = 'u8[4096]{0}', space=vmem, size = 0x1000, scoped, tag = 'input window, operand 1, single buffered']
    #allocation7 [shape = 's32[1]{0}', space=sflag, size = 0x4, scoped, tag = 'scoped memory for tpu_custom_call.1']
    #allocation8 [shape = 'u8[16384]{0}', space=vmem, size = 0x4000, scoped, tag = 'output window, operand 0']
    %7 = vsyncpa [#allocation4], 0
    %s8 = scalar_lea.sflag [#allocation4], 1
    %9 = vsyncpa %s8, 0
    %10 = vsyncpa [#allocation7], 0
    %11 = vsyncpa [#allocation5], 0
    %s12 = scalar_lea.sflag [#allocation5], 1
    %13 = vsyncpa %s12, 0
    loop: start=0, step=1, limit=4
    $region2: #{tpu_custom_call.1} parent=1 // loop_pre_header
      _
    $region3: #{tpu_custom_call.1} parent=1 // loop_header
      %s15 = sphi 0, %s19
      %p16 = scmp.ge.s32.totalorder %s15, 4
      %s25 = sphi 0, %s27
      %s28 = sphi 0, %s25
      %s29 = sphi 0, %s28
      %s45 = sphi 0, %s29
      %s49 = sphi 0, %s49
      %s51 = sphi 0, %s49
      %s52 = sphi 0, %s51
      %s66 = sphi 0, %s52
      %s72 = sphi 0, %s74
      %s75 = sphi 0, %s72
      %s76 = sphi 0, %s75
      %s92 = sphi 0, %s76
    $region4: #{tpu_custom_call.1} parent=1 // loop_header_branch
      %18 = sbr.rel (%p16) target = $region8
    $region5: #{tpu_custom_call.1} parent=1 // loop_body
      %s20 = ssub.s32 %s15, 1
      %s21 = ssub.s32 %s15, 2
      %s22 = sadd.s32 %s15, 1
      %s23 = ssub.s32 %s15, %s22
      %p24 = scmp.eq.s32.totalorder %s23, 0
      %s26 = sadd.s32 %s25, 1
      %s27 = scalar_select %p24, %s25, %s26
      %p30 = pneg %p24
      %p31 = scmp.eq.s32.totalorder %s15, 1
      %p32 = por %p30, %p31
      %p33 = scmp.ne.s32.totalorder %s25, %s28
      %p34 = scmp.eq.s32.totalorder %s15, 0
      %p35 = por %p33, %p34
      %p36 = scmp.ne.s32.totalorder %s25, %s28
      %p37 = scmp.eq.s32.totalorder %s20, 1
      %p38 = por %p36, %p37
      %p39 = scmp.ne.s32.totalorder %s28, %s29
      %p40 = scmp.eq.s32.totalorder %s20, 0
      %p41 = por %p39, %p40
      %p42 = scmp.ne.s32.totalorder %s28, %s29
      %p43 = scmp.eq.s32.totalorder %s21, 1
      %p44 = por %p42, %p43
      %p46 = scmp.ne.s32.totalorder %s29, %s45
      %p47 = scmp.eq.s32.totalorder %s21, 0
      %p48 = por %p46, %p47
      %s50 = sadd.s32 %s49, 1
      %p53 = scmp.eq.s32.totalorder %s15, 1
      %p54 = scmp.ne.s32.totalorder %s49, %s51
      %p55 = scmp.eq.s32.totalorder %s15, 0
      %p56 = por %p54, %p55
      %p57 = scmp.ne.s32.totalorder %s49, %s51
      %p58 = scmp.eq.s32.totalorder %s20, 1
      %p59 = por %p57, %p58
      %p60 = scmp.ne.s32.totalorder %s51, %s52
      %p61 = scmp.eq.s32.totalorder %s20, 0
      %p62 = por %p60, %p61
      %p63 = scmp.ne.s32.totalorder %s51, %s52
      %p64 = scmp.eq.s32.totalorder %s21, 1
      %p65 = por %p63, %p64
      %p67 = scmp.ne.s32.totalorder %s52, %s66
      %p68 = scmp.eq.s32.totalorder %s21, 0
      %p69 = por %p67, %p68
      %s70 = ssub.s32 %s15, %s22
      %p71 = scmp.eq.s32.totalorder %s70, 0
      %s73 = sadd.s32 %s72, 1
      %s74 = scalar_select %p71, %s72, %s73
      %p77 = pneg %p71
      %p78 = scmp.eq.s32.totalorder %s15, 1
      %p79 = por %p77, %p78
      %p80 = scmp.ne.s32.totalorder %s72, %s75
      %p81 = scmp.eq.s32.totalorder %s15, 0
      %p82 = por %p80, %p81
      %p83 = scmp.ne.s32.totalorder %s72, %s75
      %p84 = scmp.eq.s32.totalorder %s20, 1
      %p85 = por %p83, %p84
      %p86 = scmp.ne.s32.totalorder %s75, %s76
      %p87 = scmp.eq.s32.totalorder %s20, 0
      %p88 = por %p86, %p87
      %p89 = scmp.ne.s32.totalorder %s75, %s76
      %p90 = scmp.eq.s32.totalorder %s21, 1
      %p91 = por %p89, %p90
      %p93 = scmp.ne.s32.totalorder %s76, %s92
      %p94 = scmp.eq.s32.totalorder %s21, 0
      %p95 = por %p93, %p94
      %p96 = scmp.le.s32.totalorder 1, %s15
      %p97 = scmp.lt.s32.totalorder %s15, 3
      %p98 = pnand %p96, %p97
      %p99 = pneg %p98
      // Predicated region
      $region9: #{tpu_custom_call.1} parent=5 // pred_check
        _
      $region10: #{tpu_custom_call.1} parent=5 // pred_check_branch
        %101 = sbr.rel (%p98) target = $region12
      $region11: #{tpu_custom_call.1} parent=5 // pred_region
        %s102 = ssub.s32 %s15, 1
        // Predicated region
        $region13: #{tpu_custom_call.1} parent=11 // pred_check
          %p103 = pneg %p62
        $region14: #{tpu_custom_call.1} parent=11 // pred_check_branch
          %105 = sbr.rel (%p103) target = $region16
        $region15: #{tpu_custom_call.1} parent=11 // pred_region
          %107 = vsyncadd [#allocation7], 0
          %s109 = sshll.u32 %s1, 4
          %s110 = int_to_ptr.hbm [resolvable:$true] %s109
          %s111 = sshll.u32 [#allocation6], 4
          %s112 = int_to_ptr.vmem [resolvable:$true] %s111
          %114 = dma.hbm_to_vmem [thread:$0]  %s110, 128, %s112, [#allocation7]
        $region16: #{tpu_custom_call.1} parent=11 // pred_fallthru
          _
      $region12: #{tpu_custom_call.1} parent=5 // pred_fallthru
        _
      %p115 = scmp.lt.s32.totalorder %s15, 2
      // Predicated region
      $region17: #{tpu_custom_call.1} parent=5 // pred_check
        %p116 = pneg %p115
      $region18: #{tpu_custom_call.1} parent=5 // pred_check_branch
        %118 = sbr.rel (%p116) target = $region20
      $region19: #{tpu_custom_call.1} parent=5 // pred_region
        // Predicated region
        $region21: #{tpu_custom_call.1} parent=19 // pred_check
          %p119 = pneg %p35
        $region22: #{tpu_custom_call.1} parent=19 // pred_check_branch
          %121 = sbr.rel (%p119) target = $region24
        $region23: #{tpu_custom_call.1} parent=19 // pred_region
          %s122 = sand.u32 %s25, 1
          %s123 = scalar_lea.sflag [#allocation4], %s122
          %s124 = sand.u32 %s25, 1
          %s125 = smul.addr %s124, 24
          %s126 = scalar_lea.vmem [#allocation3], %s125
          %128 = vsyncadd %s123, 0
          %s129 = smul.addr %s15, 3
          %s130 = smul.addr %s129, 8
          %s131 = scalar_lea.hbm %s0, %s130
          %s133 = sshll.u32 %s131, 4
          %s134 = int_to_ptr.hbm [resolvable:$true] %s133
          %s135 = sshll.u32 %s126, 4
          %s136 = int_to_ptr.vmem [resolvable:$true] %s135
          %138 = dma.hbm_to_vmem [thread:$0]  %s134, 384, %s136, %s123
        $region24: #{tpu_custom_call.1} parent=19 // pred_fallthru
          _
      $region20: #{tpu_custom_call.1} parent=5 // pred_fallthru
        _
      %p139 = scmp.le.s32.totalorder 1, %s15
      %p140 = scmp.lt.s32.totalorder %s15, 3
      %p141 = pnand %p139, %p140
      %p142 = pneg %p141
      // Predicated region
      $region25: #{tpu_custom_call.1} parent=5 // pred_check
        _
      $region26: #{tpu_custom_call.1} parent=5 // pred_check_branch
        %144 = sbr.rel (%p141) target = $region28
      $region27: #{tpu_custom_call.1} parent=5 // pred_region
        %s145 = ssub.s32 %s15, 1
        %s146 = sand.u32 %s28, 1
        %s147 = scalar_lea.sflag [#allocation4], %s146
        %s148 = sand.u32 %s28, 1
        %s149 = smul.addr %s148, 24
        %s150 = scalar_lea.vmem [#allocation3], %s149
        // Predicated region
        $region29: #{tpu_custom_call.1} parent=27 // pred_check
          %p151 = pneg %p41
        $region30: #{tpu_custom_call.1} parent=27 // pred_check_branch
          %153 = sbr.rel (%p151) target = $region32
        $region31: #{tpu_custom_call.1} parent=27 // pred_region
          %155 = dma.done %s147, 384
        $region32: #{tpu_custom_call.1} parent=27 // pred_fallthru
          _
        // Predicated region
        $region33: #{tpu_custom_call.1} parent=27 // pred_check
          %p156 = pneg %p62
        $region34: #{tpu_custom_call.1} parent=27 // pred_check_branch
          %158 = sbr.rel (%p156) target = $region36
        $region35: #{tpu_custom_call.1} parent=27 // pred_region
          %160 = dma.done [#allocation7], 128
        $region36: #{tpu_custom_call.1} parent=27 // pred_fallthru
          _
        %s161 = sand.u32 %s28, 1
        %s162 = scalar_lea.sflag [#allocation4], %s161
        %s163 = sand.u32 %s28, 1
        %s164 = smul.addr %s163, 24
        %s165 = scalar_lea.vmem [#allocation3], %s164
        %p166 = pneg %p41
        %p167 = pneg %p38
        %p168 = pneg %p62
        %p169 = pneg %p59
        %p170 = pneg %p88
        %p171 = pneg %p85
        %s172 = sand.u32 %s75, 1
        %s173 = scalar_lea.sflag [#allocation5], %s172
        %s174 = sand.u32 %s75, 1
        %s175 = smul.addr %s174, 16
        %s176 = scalar_lea.vmem [#allocation8], %s175
        %v177 = vld [vmem:[%s150] sm:$0xff]
        %v178 = vld [vmem:[%s150 + $0x8] sm:$0xff]
        %v179 = vld [vmem:[%s150 + $0x10] sm:$0xff]
        %v180 = vlaneseq
        %v181 = vand.u32 %v180, 127
        %v182 = vadd.s32 %v181, 128
        %v183 = vadd.s32 %v181, 256
        %vm184 = vcmp.lt.s32.totalorder %v181, 0
        %v185 = vsub.s32 0, %v181
        %v186 = vsel %vm184, %v185, %v181
        %v187 = vshrl.u32 %v186, 4
        %v188 = vand.u32 %v186, 15
        %v189 = vsub.s32 0, %v188
        %v190 = vsel %vm184, %v189, %v188
        %vm191 = vcmp.lt.s32.totalorder %v182, 0
        %v192 = vsub.s32 0, %v182
        %v193 = vsel %vm191, %v192, %v182
        %v194 = vshrl.u32 %v193, 4
        %v195 = vand.u32 %v193, 15
        %v196 = vsub.s32 0, %v195
        %v197 = vsel %vm191, %v196, %v195
        %vm198 = vcmp.lt.s32.totalorder %v183, 0
        %v199 = vsub.s32 0, %v183
        %v200 = vsel %vm198, %v199, %v183
        %v201 = vshrl.u32 %v200, 4
        %v202 = vand.u32 %v200, 15
        %v203 = vsub.s32 0, %v202
        %v204 = vsel %vm198, %v203, %v202
        %vm205 = vcmp.ne.s32.totalorder %v190, 0
        %vm206 = vcmp.ne.s32.totalorder %v197, 0
        %vm207 = vcmp.ne.s32.totalorder %v204, 0
        %vm208 = vcmp.lt.s32.totalorder %v190, 0
        %vm209 = vcmp.lt.s32.totalorder %v197, 0
        %vm210 = vcmp.lt.s32.totalorder %v204, 0
        %vm211 = vmand %vm208, %vm205
        %vm212 = vmand %vm209, %vm206
        %vm213 = vmand %vm210, %vm207
        %v214 = vadd.s32 %v190, 16
        %v215 = vadd.s32 %v197, 16
        %v216 = vadd.s32 %v204, 16
        %v217 = vsel %vm211, %v214, %v190
        %v218 = vsel %vm212, %v215, %v197
        %v219 = vsel %vm213, %v216, %v204
        %vm220 = vcmp.ne.s32.totalorder %v217, 0
        %vm221 = vcmp.ne.s32.totalorder %v218, 0
        %vm222 = vcmp.ne.s32.totalorder %v219, 0
        %v223 = vsel %vm220, 1, 0
        %v224 = vsel %vm221, 1, 0
        %v225 = vsel %vm222, 1, 0
        %v226 = vcvt.s32.f32 %v223
        %v227 = vcvt.s32.f32 %v224
        %v228 = vcvt.s32.f32 %v225
        %vm229 = vcmp.ne.s32.totalorder %v217, 1
        %vm230 = vcmp.ne.s32.totalorder %v218, 1
        %vm231 = vcmp.ne.s32.totalorder %v219, 1
        %v232 = vsel %vm229, 1, 0
        %v233 = vsel %vm230, 1, 0
        %v234 = vsel %vm231, 1, 0
        %v235 = vcvt.s32.f32 %v232
        %v236 = vcvt.s32.f32 %v233
        %v237 = vcvt.s32.f32 %v234
        %v238 = vmul.f32 %v177, %v226
        %v239 = vmul.f32 %v178, %v227
        %v240 = vmul.f32 %v179, %v228
        %v241 = vmul.f32 %v177, %v235
        %v242 = vmul.f32 %v178, %v236
        %v243 = vmul.f32 %v179, %v237
        %244 = vst [vmem:[#allocation2] sm:$0xff] %v238
        %245 = vst [vmem:[#allocation2 + $0x8] sm:$0xff] %v239
        %249 = vrot.lane.b32.xlu0 %v177, 127
        %v250 = vpop.permute.xlu0 %249
        %251 = vrot.lane.b32.xlu0 %v178, 127
        %v252 = vpop.permute.xlu0 %251
        %253 = vrot.lane.b32.xlu0 %v179, 127
        %v254 = vpop.permute.xlu0 %253
        %vm255 = vcmask 1039360
        %v256 = vsel %vm255, %v250, %v252
        %v257 = vsel %vm255, %v252, %v254
        %260 = vst [vmem:[#allocation2 + $0x10] sm:$0xff] %v256
        %261 = vst [vmem:[#allocation2 + $0x18] sm:$0xff] %v257
        %265 = vrot.lane.b32.xlu0 %v241, 126
        %v266 = vpop.permute.xlu0 %265
        %267 = vrot.lane.b32.xlu0 %v242, 126
        %v268 = vpop.permute.xlu0 %267
        %269 = vrot.lane.b32.xlu0 %v243, 126
        %v270 = vpop.permute.xlu0 %269
        %vm271 = vcmask 1031168
        %v272 = vsel %vm271, %v266, %v268
        %v273 = vsel %vm271, %v268, %v270
        %276 = vst [vmem:[#allocation2 + $0x20] sm:$0xff] %v272
        %277 = vst [vmem:[#allocation2 + $0x28] sm:$0xff] %v273
        %281 = vrot.lane.b32.xlu0 %v238, 112
        %v282 = vpop.permute.xlu0 %281
        %283 = vrot.lane.b32.xlu0 %v239, 112
        %v284 = vpop.permute.xlu0 %283
        %285 = vrot.lane.b32.xlu0 %v240, 112
        %v286 = vpop.permute.xlu0 %285
        %vm287 = vcmask 916480
        %v288 = vsel %vm287, %v282, %v284
        %v289 = vsel %vm287, %v284, %v286
        %292 = vst [vmem:[#allocation2 + $0x30] sm:$0xff] %v288
        %293 = vst [vmem:[#allocation2 + $0x38] sm:$0xff] %v289
        %294 = vrot.lane.b32.xlu0 %v177, 111
        %v295 = vpop.permute.xlu0 %294
        %296 = vrot.lane.b32.xlu0 %v178, 111
        %v297 = vpop.permute.xlu0 %296
        %298 = vrot.lane.b32.xlu0 %v179, 111
        %v299 = vpop.permute.xlu0 %298
        %vm300 = vcmask 908288
        %v301 = vsel %vm300, %v295, %v297
        %v302 = vsel %vm300, %v297, %v299
        %305 = vst [vmem:[#allocation2 + $0x40] sm:$0xff] %v301
        %306 = vst [vmem:[#allocation2 + $0x48] sm:$0xff] %v302
        %307 = vrot.lane.b32.xlu0 %v241, 110
        %v308 = vpop.permute.xlu0 %307
        %309 = vrot.lane.b32.xlu0 %v242, 110
        %v310 = vpop.permute.xlu0 %309
        %311 = vrot.lane.b32.xlu0 %v243, 110
        %v312 = vpop.permute.xlu0 %311
        %vm313 = vcmask 900096
        %v314 = vsel %vm313, %v308, %v310
        %v315 = vsel %vm313, %v310, %v312
        %318 = vst [vmem:[#allocation2 + $0x50] sm:$0xff] %v314
        %319 = vst [vmem:[#allocation2 + $0x58] sm:$0xff] %v315
        %320 = vrot.lane.b32.xlu0 %v238, 96
        %v321 = vpop.permute.xlu0 %320
        %322 = vrot.lane.b32.xlu0 %v239, 96
        %v323 = vpop.permute.xlu0 %322
        %324 = vrot.lane.b32.xlu0 %v240, 96
        %v325 = vpop.permute.xlu0 %324
        %vm326 = vcmask 785408
        %v327 = vsel %vm326, %v321, %v323
        %v328 = vsel %vm326, %v323, %v325
        %331 = vst [vmem:[#allocation2 + $0x60] sm:$0xff] %v327
        %332 = vst [vmem:[#allocation2 + $0x68] sm:$0xff] %v328
        %333 = vrot.lane.b32.xlu0 %v177, 95
        %v334 = vpop.permute.xlu0 %333
        %335 = vrot.lane.b32.xlu0 %v178, 95
        %v336 = vpop.permute.xlu0 %335
        %337 = vrot.lane.b32.xlu0 %v179, 95
        %v338 = vpop.permute.xlu0 %337
        %vm339 = vcmask 777216
        %v340 = vsel %vm339, %v334, %v336
        %v341 = vsel %vm339, %v336, %v338
        %344 = vst [vmem:[#allocation2 + $0x70] sm:$0xff] %v340
        %345 = vst [vmem:[#allocation2 + $0x78] sm:$0xff] %v341
        %346 = vrot.lane.b32.xlu0 %v241, 94
        %v347 = vpop.permute.xlu0 %346
        %348 = vrot.lane.b32.xlu0 %v242, 94
        %v349 = vpop.permute.xlu0 %348
        %350 = vrot.lane.b32.xlu0 %v243, 94
        %v351 = vpop.permute.xlu0 %350
        %vm352 = vcmask 769024
        %v353 = vsel %vm352, %v347, %v349
        %v354 = vsel %vm352, %v349, %v351
        %357 = vst [vmem:[#allocation2 + $0x80] sm:$0xff] %v353
        %358 = vst [vmem:[#allocation2 + $0x88] sm:$0xff] %v354
        %v359 = vld [vmem:[#allocation6] sm:$0xff]
        %v360 = vld [vmem:[#allocation2] sm:$0xff]
        %v361 = vld [vmem:[#allocation2 + $0x8] sm:$0xff]
        %v362 = vld [vmem:[#allocation2 + $0x10] sm:$0xff]
        %v363 = vld [vmem:[#allocation2 + $0x18] sm:$0xff]
        %v364 = vld [vmem:[#allocation2 + $0x20] sm:$0xff]
        %v365 = vld [vmem:[#allocation2 + $0x28] sm:$0xff]
        %v366 = vld [vmem:[#allocation2 + $0x30] sm:$0xff]
        %v367 = vld [vmem:[#allocation2 + $0x38] sm:$0xff]
        %v368 = vld [vmem:[#allocation2 + $0x40] sm:$0xff]
        %v369 = vld [vmem:[#allocation2 + $0x48] sm:$0xff]
        %v370 = vld [vmem:[#allocation2 + $0x50] sm:$0xff]
        %v371 = vld [vmem:[#allocation2 + $0x58] sm:$0xff]
        %v372 = vld [vmem:[#allocation2 + $0x60] sm:$0xff]
        %v373 = vld [vmem:[#allocation2 + $0x68] sm:$0xff]
        %v374 = vld [vmem:[#allocation2 + $0x70] sm:$0xff]
        %v375 = vld [vmem:[#allocation2 + $0x78] sm:$0xff]
        %v376 = vld [vmem:[#allocation2 + $0x80] sm:$0xff]
        %v377 = vld [vmem:[#allocation2 + $0x88] sm:$0xff]
        %vm378 = vcmask 588800
        %v380 = vsel %vm378, %v359, 0
        %382 = vmatpush.msra.mxu0 0.0
        %383 = vmatpush.msra.mxu0 0.0
        %384 = vmatpush.msra.mxu0 0.0
        %385 = vmatpush.msra.mxu0 0.0
        %386 = vmatpush.msra.mxu0 0.0
        %387 = vmatpush.msra.mxu0 0.0
        %388 = vmatpush.msra.mxu0 0.0
        %389 = vmatpush.msra.mxu0 %v376
        %390 = vmatpush.msra.mxu0 %v374
        %391 = vmatpush.msra.mxu0 %v372
        %392 = vmatpush.msra.mxu0 %v370
        %393 = vmatpush.msra.mxu0 %v368
        %394 = vmatpush.msra.mxu0 %v366
        %395 = vmatpush.msra.mxu0 %v364
        %396 = vmatpush.msra.mxu0 %v362
        %397 = vmatpush.msra.mxu0 %v360
        %398 = vmatmul.f32.gmra.mxu0 %v380
        %v399 = vpop.f32.mrf.mxu0
        %v400 = vadd.f32 0.0, %v399
        %401 = vdwg.mxu0
        %402 = vmatpush.msra.mxu0 0.0
        %403 = vmatpush.msra.mxu0 0.0
        %404 = vmatpush.msra.mxu0 0.0
        %405 = vmatpush.msra.mxu0 0.0
        %406 = vmatpush.msra.mxu0 0.0
        %407 = vmatpush.msra.mxu0 0.0
        %408 = vmatpush.msra.mxu0 0.0
        %409 = vmatpush.msra.mxu0 %v377
        %410 = vmatpush.msra.mxu0 %v375
        %411 = vmatpush.msra.mxu0 %v373
        %412 = vmatpush.msra.mxu0 %v371
        %413 = vmatpush.msra.mxu0 %v369
        %414 = vmatpush.msra.mxu0 %v367
        %415 = vmatpush.msra.mxu0 %v365
        %416 = vmatpush.msra.mxu0 %v363
        %417 = vmatpush.msra.mxu0 %v361
        %418 = vmatmul.f32.gmra.mxu0 %v380
        %v419 = vpop.f32.mrf.mxu0
        %v420 = vadd.f32 0.0, %v419
        %421 = vdwg.mxu0
        %422 = vst [vmem:[%s176] sm:$0xff] %v400
        %423 = vst [vmem:[%s176 + $0x8] sm:$0xff] %v420
        %s424 = sand.u32 %s75, 1
        %s425 = scalar_lea.sflag [#allocation5], %s424
        %s426 = sand.u32 %s75, 1
        %s427 = smul.addr %s426, 16
        %s428 = scalar_lea.vmem [#allocation8], %s427
        // Predicated region
        $region37: #{tpu_custom_call.1} parent=27 // pred_check
          %p429 = pneg %p85
        $region38: #{tpu_custom_call.1} parent=27 // pred_check_branch
          %431 = sbr.rel (%p429) target = $region40
        $region39: #{tpu_custom_call.1} parent=27 // pred_region
          %433 = vsyncadd %s425, 0
          %s434 = smul.addr %s20, 2
          %s435 = smul.addr %s434, 8
          %s436 = scalar_lea.hbm %s2, %s435
          %s438 = sshll.u32 %s428, 4
          %s439 = int_to_ptr.vmem [resolvable:$true] %s438
          %s440 = sshll.u32 %s436, 4
          %s441 = int_to_ptr.hbm [resolvable:$true] %s440
          %443 = dma.vmem_to_hbm [thread:$0]  %s439, 256, %s441, %s425
        $region40: #{tpu_custom_call.1} parent=27 // pred_fallthru
          _
      $region28: #{tpu_custom_call.1} parent=5 // pred_fallthru
        _
      %p444 = scmp.le.s32.totalorder 2, %s15
      // Predicated region
      $region41: #{tpu_custom_call.1} parent=5 // pred_check
        %p445 = pneg %p444
      $region42: #{tpu_custom_call.1} parent=5 // pred_check_branch
        %447 = sbr.rel (%p445) target = $region44
      $region43: #{tpu_custom_call.1} parent=5 // pred_region
        %s448 = ssub.s32 %s15, 2
        // Predicated region
        $region45: #{tpu_custom_call.1} parent=43 // pred_check
          %p449 = pneg %p91
        $region46: #{tpu_custom_call.1} parent=43 // pred_check_branch
          %451 = sbr.rel (%p449) target = $region48
        $region47: #{tpu_custom_call.1} parent=43 // pred_region
          %s452 = sand.u32 %s76, 1
          %s453 = scalar_lea.sflag [#allocation5], %s452
          %s454 = sand.u32 %s76, 1
          %s455 = smul.addr %s454, 16
          %s456 = scalar_lea.vmem [#allocation8], %s455
          %458 = dma.done %s453, 256
        $region48: #{tpu_custom_call.1} parent=43 // pred_fallthru
          _
      $region44: #{tpu_custom_call.1} parent=5 // pred_fallthru
        _
    $region6: #{tpu_custom_call.1} parent=1 // loop_footer
      %s19 = sadd.s32 1, %s15
    $region7: #{tpu_custom_call.1} parent=1 // loop_footer_branch
      %14 = sbr.rel target = $region3
    $region8: #{tpu_custom_call.1} parent=1 // loop_exit
      _
    %459 = vsyncpa [#allocation4], 1
    %s460 = scalar_lea.sflag [#allocation4], 1
    %461 = vsyncpa %s460, 1
    %462 = vsyncpa [#allocation7], 1
    %463 = vsyncpa [#allocation5], 1
    %s464 = scalar_lea.sflag [#allocation5], 1
    %465 = vsyncpa %s464, 1

</llo_original>
